<compile_context>
chip_gen: v6e
topology: v6e:2x2x1
jax: 0.10.0
libtpu: 0.0.40
codegen_flags: <defaults>
</compile_context>

<pallas_src>
import functools

import jax
import jax.numpy as jnp
from jax import lax
from jax.experimental import pallas as pl
from jax.experimental.pallas import tpu as pltpu

_MEAN = (0.485, 0.456, 0.406)
_STD = (0.229, 0.224, 0.225)
_LUMA = (0.299, 0.587, 0.114)          # ITU-R 601-2 luma (PIL / torchvision)
_SOLARIZE_THR = 128.0 / 255.0          # PIL default solarize threshold


@functools.lru_cache(maxsize=None)
def _rev_lowers(rows, cols):
    """True iff a lane reversal (lax.rev on axis=-1) lowers in Pallas TPU."""
    def probe(x_ref, o_ref):
        o_ref[...] = jnp.flip(x_ref[...], axis=-1)
    try:
        fn = pl.pallas_call(
            probe, out_shape=jax.ShapeDtypeStruct((rows, cols), jnp.float32))
        jax.jit(fn).lower(
            jax.ShapeDtypeStruct((rows, cols), jnp.float32)).compile()
        return True
    except Exception:
        return False


def _three_aug_kernel(flip_ref, choice_ref, br_ref, co_ref, sa_ref,   # SMEM
                      x_ref, bh_ref, bw_ref,                          # VMEM in
                      o_ref,                                          # VMEM out
                      t,                                              # scratch
                      *, hh, ww, use_rev):
    bt = x_ref.shape[0]
    b0 = pl.program_id(0) * bt
    H, W = hh, ww
    l0, l1, l2 = _LUMA

    # Per-channel Normalize constants as (3H, 1) column maps (channels are
    # stacked along sublanes).  Built once per grid step, hoisted out of the
    # per-image loop.
    mean_map = jnp.concatenate(
        [jnp.full((H, 1), m, jnp.float32) for m in _MEAN], axis=0)
    istd_map = jnp.concatenate(
        [jnp.full((H, 1), 1.0 / s, jnp.float32) for s in _STD], axis=0)

    if not use_rev:
        # Fallback flip path: W-reversal exchange matrix, built once per grid
        # step (NOT per image) and applied below as one batched (3H,W)@(W,W)
        # f32 matmul (exact permutation).
        r = lax.broadcasted_iota(jnp.int32, (W, W), 0)
        c = lax.broadcasted_iota(jnp.int32, (W, W), 1)
        rev = jnp.where(r + c == W - 1, 1.0, 0.0).astype(jnp.float32)

    @pl.loop(0, bt)
    def _(i):
        flip = flip_ref[b0 + i]
        choice = choice_ref[b0 + i]
        br = br_ref[b0 + i]
        co = co_ref[b0 + i]
        sa = sa_ref[b0 + i]

        # ---- RandomHorizontalFlip (only the taken branch executes) ---------
        @pl.when(flip != 0)
        def _():
            xi = x_ref[i].astype(jnp.float32)
            if use_rev:
                t[...] = jnp.flip(xi, axis=-1)          # XLU lane reversal
            else:
                t[...] = jnp.dot(xi, rev, preferred_element_type=jnp.float32)

        @pl.when(flip == 0)
        def _():
            t[...] = x_ref[i].astype(jnp.float32)

        # ---- RandomChoice([GrayScale, Solarization, GaussianBlur]) ---------
        # Only the chosen branch runs; results are written back in place
        # (t always holds this image's data since the flip stage filled it).
        @pl.when(choice == 0)            # grayscale, replicated to 3 channels
        def _():
            g = (l0 * t[0:H, :] + l1 * t[H:2 * H, :] + l2 * t[2 * H:3 * H, :])
            t[0:H, :] = g
            t[H:2 * H, :] = g
            t[2 * H:3 * H, :] = g

        @pl.when(choice == 1)            # solarize
        def _():
            v = t[...]
            t[...] = jnp.where(v >= _SOLARIZE_THR, 1.0 - v, v)

        @pl.when(choice == 2)            # separable gaussian blur, bf16 MXU
        def _():
            # TODO(synk): PIL draws a random blur radius per call; a fixed
            # sigma is used here.
            xb = t[...].astype(jnp.bfloat16)
            bh = bh_ref[...]                             # (H,H) bf16, left mult
            for ch in range(3):
                t[ch * H:(ch + 1) * H, :] = jnp.dot(
                    bh, xb[ch * H:(ch + 1) * H, :],
                    preferred_element_type=jnp.float32)
            # W-axis pass batched over all 3 channels: one (3H,W)@(W,W) matmul.
            t[...] = jnp.dot(t[...].astype(jnp.bfloat16), bw_ref[...],
                             preferred_element_type=jnp.float32)

        # ---- ColorJitter(brightness, contrast, saturation) -----------------
        # TODO(synk): torchvision permutes the 3 jitter ops per sample; a
        # fixed brightness -> contrast -> saturation order is used here.
        # Brightness result is written back to scratch so nothing big stays
        # live across the mean-reduction barrier below.
        t[...] = jnp.clip(t[...] * br, 0.0, 1.0)
        gm = jnp.mean(l0 * t[0:H, :] + l1 * t[H:2 * H, :]
                      + l2 * t[2 * H:3 * H, :])          # contrast reference
        # Contrast -> saturation -> Normalize fused into the output store.
        cimg = jnp.clip(co * t[...] + (1.0 - co) * gm, 0.0, 1.0)
        gi = (l0 * cimg[0:H, :] + l1 * cimg[H:2 * H, :]
              + l2 * cimg[2 * H:3 * H, :])
        gi3 = jnp.concatenate([gi, gi, gi], axis=0)
        y = jnp.clip(sa * cimg + (1.0 - sa) * gi3, 0.0, 1.0)
        # ToTensor (input already float in [0,1]) + Normalize, single store.
        o_ref[i] = ((y - mean_map) * istd_map).astype(o_ref.dtype)


def _gaussian(n, sigma):
    idx = jnp.arange(n, dtype=jnp.float32)
    d = idx[:, None] - idx[None, :]
    return jnp.exp(-(d * d) / (2.0 * sigma * sigma))


def _pick_bt(batch, block_b):
    """Largest images-per-step divisor that keeps >=2 (ideally even) grid steps."""
    divs = [d for d in range(1, min(block_b, batch) + 1) if batch % d == 0]
    multi = [d for d in divs if batch // d >= 2]          # v7x: keep both TCs busy
    even = [d for d in multi if (batch // d) % 2 == 0]    # balanced core split
    for cand in (even, multi, divs):
        if cand:
            return max(cand)
    return 1


def three_augmentation(x, key, color_jitter=0.4, blur_sigma=1.0,
                       block_b=8, out_dtype=jnp.float32):
    """x: (B, 3, H, W) float in [0, 1]. Returns normalized (B, 3, H, W)."""
    B, C, H, W = x.shape
    assert C == 3

    bt = _pick_bt(B, block_b)
    use_rev = _rev_lowers(3 * H, W)

    # Per-sample random decisions (deterministic given `key`), fed via SMEM.
    kf, kc, kj = jax.random.split(key, 3)
    flip = jax.random.bernoulli(kf, 0.5, (B,)).astype(jnp.int32)
    choice = jax.random.randint(kc, (B,), 0, 3, dtype=jnp.int32)
    lo = max(0.0, 1.0 - color_jitter)
    jit = jax.random.uniform(kj, (3, B), minval=lo, maxval=1.0 + color_jitter,
                             dtype=jnp.float32)

    # Fixed-sigma separable blur matrices, bf16 (MXU-native).  Constant block
    # index -> DMA'd once and reused by every grid step.
    gh = _gaussian(H, blur_sigma)
    gw = _gaussian(W, blur_sigma)
    bh = (gh / jnp.sum(gh, axis=1, keepdims=True)).astype(jnp.bfloat16)
    bw = (gw / jnp.sum(gw, axis=0, keepdims=True)).astype(jnp.bfloat16)

    # Channels stacked along sublanes: (B, 3, H, W) -> (B, 3H, W) (free).
    xs = x.reshape(B, 3 * H, W)

    itemsize_in = jnp.dtype(x.dtype).itemsize
    itemsize_out = jnp.dtype(out_dtype).itemsize
    need = (2 * bt * 3 * H * W * (itemsize_in + itemsize_out)   # dbl-buffered I/O
            + 2 * 2 * (H * H + W * W)                           # bf16 blur mats
            + 3 * H * W * 4                                      # scratch
            + (2 << 20))                                         # headroom
    vmem_limit = int(min(max(need, 32 << 20), 64 << 20))         # 64 MiB: v7x cap

    grid_spec = pltpu.PrefetchScalarGridSpec(
        num_scalar_prefetch=5,
        grid=(B // bt,),
        in_specs=[
            pl.BlockSpec((bt, 3 * H, W),
                         lambda b, f, c, r, o, s: (b, 0, 0)),        # images
            pl.BlockSpec((H, H), lambda b, f, c, r, o, s: (0, 0)),   # blur H
            pl.BlockSpec((W, W), lambda b, f, c, r, o, s: (0, 0)),   # blur W
        ],
        out_specs=pl.BlockSpec((bt, 3 * H, W),
                               lambda b, f, c, r, o, s: (b, 0, 0)),
        scratch_shapes=[pltpu.VMEM((3 * H, W), jnp.float32)],
    )

    kernel = functools.partial(_three_aug_kernel, hh=H, ww=W, use_rev=use_rev)

    out = pl.pallas_call(
        kernel,
        out_shape=jax.ShapeDtypeStruct((B, 3 * H, W), out_dtype),
        grid_spec=grid_spec,
        compiler_params=pltpu.CompilerParams(
            dimension_semantics=("parallel",),
            vmem_limit_bytes=vmem_limit),
    )(flip, choice, jit[0], jit[1], jit[2], xs, bh, bw)
    return out.reshape(B, 3, H, W)


if __name__ == "__main__":
    key = jax.random.PRNGKey(0)
    kx, ka = jax.random.split(key)
    # Small shapes: batch=2, channels=3 (RGB required), spatial=16
    x = jax.random.uniform(kx, (2, 3, 16, 16), dtype=jnp.float32)
    out = three_augmentation(x, ka)
    jax.block_until_ready(out)
    assert out.shape == (2, 3, 16, 16) and out.dtype == jnp.float32
    print("KERNEL_OK")
</pallas_src>

<mosaic_0001>
module attributes {stable_mosaic.version = 11 : i64} {
  func.func @_three_aug_kernel(%arg0: i32, %arg1: memref<2xi32, #tpu.memory_space<smem>>, %arg2: memref<2xi32, #tpu.memory_space<smem>>, %arg3: memref<2xf32, #tpu.memory_space<smem>>, %arg4: memref<2xf32, #tpu.memory_space<smem>>, %arg5: memref<2xf32, #tpu.memory_space<smem>>, %arg6: memref<1x48x16xf32, #tpu.memory_space<vmem>>, %arg7: memref<16x16xbf16, #tpu.memory_space<vmem>>, %arg8: memref<16x16xbf16, #tpu.memory_space<vmem>>, %arg9: memref<1x48x16xf32, #tpu.memory_space<vmem>>, %arg10: memref<48x16xf32, #tpu.memory_space<vmem>>) attributes {dimension_semantics = [#tpu.dimension_semantics<parallel>], iteration_bounds = array<i64: 2>, scalar_prefetch = 5 : i64, scratch_operands = 1 : i64, tpu.core_type = #tpu.core_type<tc>, window_params = [{transform_indices = @transform_0, window_bounds = array<i64: 1, 48, 16>}, {pipeline_mode = #tpu.pipeline_mode<synchronous>, transform_indices = @transform_1, window_bounds = array<i64: 16, 16>}, {pipeline_mode = #tpu.pipeline_mode<synchronous>, transform_indices = @transform_2, window_bounds = array<i64: 16, 16>}, {transform_indices = @transform_3, window_bounds = array<i64: 1, 48, 16>}]} {
    %c1_i32 = arith.constant 1 : i32
    %0 = arith.muli %arg0, %c1_i32 : i32
    %cst = arith.constant 4.850000e-01 : f32
    %1 = vector.broadcast %cst : f32 to vector<16x1xf32>
    %cst_0 = arith.constant 4.560000e-01 : f32
    %2 = vector.broadcast %cst_0 : f32 to vector<16x1xf32>
    %cst_1 = arith.constant 4.060000e-01 : f32
    %3 = vector.broadcast %cst_1 : f32 to vector<16x1xf32>
    %4 = tpu.concatenate %1, %2, %3 in 0 : vector<16x1xf32>, vector<16x1xf32>, vector<16x1xf32> -> vector<48x1xf32>
    %cst_2 = arith.constant 4.36681223 : f32
    %5 = vector.broadcast %cst_2 : f32 to vector<16x1xf32>
    %cst_3 = arith.constant 4.46428585 : f32
    %6 = vector.broadcast %cst_3 : f32 to vector<16x1xf32>
    %cst_4 = arith.constant 4.44444466 : f32
    %7 = vector.broadcast %cst_4 : f32 to vector<16x1xf32>
    %8 = tpu.concatenate %5, %6, %7 in 0 : vector<16x1xf32>, vector<16x1xf32>, vector<16x1xf32> -> vector<48x1xf32>
    %9 = tpu.iota {dimensions = array<i32: 0>} : vector<16x16xi32>
    %10 = tpu.iota {dimensions = array<i32: 1>} : vector<16x16xi32>
    %11 = arith.addi %9, %10 : vector<16x16xi32>
    %c15_i32 = arith.constant 15 : i32
    %12 = vector.broadcast %c15_i32 : i32 to vector<16x16xi32>
    %13 = arith.cmpi eq, %11, %12 : vector<16x16xi32>
    %cst_5 = arith.constant 1.000000e+00 : f32
    %cst_6 = arith.constant 0.000000e+00 : f32
    %14 = vector.broadcast %cst_5 : f32 to vector<16x16xf32>
    %15 = vector.broadcast %cst_6 : f32 to vector<16x16xf32>
    %16 = arith.select %13, %14, %15 : vector<16x16xi1>, vector<16x16xf32>
    %c0_i32 = arith.constant 0 : i32
    %c1_i32_7 = arith.constant 1 : i32
    %17 = arith.muli %c0_i32, %c1_i32_7 : i32
    %c0_i32_8 = arith.constant 0 : i32
    %18 = arith.addi %c0_i32_8, %17 : i32
    %19 = arith.addi %0, %18 : i32
    %20 = arith.index_cast %19 : i32 to index
    %21 = memref.load %arg1[%20] : memref<2xi32, #tpu.memory_space<smem>>
    %22 = arith.addi %0, %18 : i32
    %23 = arith.index_cast %22 : i32 to index
    %24 = memref.load %arg2[%23] : memref<2xi32, #tpu.memory_space<smem>>
    %25 = arith.addi %0, %18 : i32
    %26 = arith.index_cast %25 : i32 to index
    %27 = memref.load %arg3[%26] : memref<2xf32, #tpu.memory_space<smem>>
    %28 = arith.addi %0, %18 : i32
    %29 = arith.index_cast %28 : i32 to index
    %30 = memref.load %arg4[%29] : memref<2xf32, #tpu.memory_space<smem>>
    %31 = arith.addi %0, %18 : i32
    %32 = arith.index_cast %31 : i32 to index
    %33 = memref.load %arg5[%32] : memref<2xf32, #tpu.memory_space<smem>>
    %c0_i32_9 = arith.constant 0 : i32
    %34 = arith.cmpi ne, %21, %c0_i32_9 : i32
    %35 = arith.extui %34 : i1 to i32
    %c0_i32_10 = arith.constant 0 : i32
    %36 = arith.cmpi ne, %35, %c0_i32_10 : i32
    scf.if %36 {
      %114 = arith.index_cast %18 : i32 to index
      %c0_46 = arith.constant 0 : index
      %c0_47 = arith.constant 0 : index
      %115 = vector.load %arg6[%114, %c0_46, %c0_47] : memref<1x48x16xf32, #tpu.memory_space<vmem>>, vector<1x48x16xf32>
      %116 = vector.shape_cast %115 : vector<1x48x16xf32> to vector<48x16xf32>
      %cst_48 = arith.constant dense<0.000000e+00> : vector<48x16xf32>
      %117 = tpu.matmul %116, %16, %cst_48 {dimension_numbers = #tpu.dot_dimension_numbers<[1], [0], [0], [1], [0, 0, 1, 1], [], []>} : vector<48x16xf32>, vector<16x16xf32>, vector<48x16xf32> -> vector<48x16xf32>
      %c0_49 = arith.constant 0 : index
      %c0_50 = arith.constant 0 : index
      %118 = vector.load %arg10[%c0_49, %c0_50] : memref<48x16xf32, #tpu.memory_space<vmem>>, vector<48x16xf32>
      tpu.vector_store %arg10[%c0_49, %c0_50], %117 {strides = array<i32>} : memref<48x16xf32, #tpu.memory_space<vmem>>, vector<48x16xf32>,
    } else {
    }
    %c0_i32_11 = arith.constant 0 : i32
    %37 = arith.cmpi eq, %21, %c0_i32_11 : i32
    %38 = arith.extui %37 : i1 to i32
    %c0_i32_12 = arith.constant 0 : i32
    %39 = arith.cmpi ne, %38, %c0_i32_12 : i32
    scf.if %39 {
      %114 = arith.index_cast %18 : i32 to index
      %c0_46 = arith.constant 0 : index
      %c0_47 = arith.constant 0 : index
      %115 = vector.load %arg6[%114, %c0_46, %c0_47] : memref<1x48x16xf32, #tpu.memory_space<vmem>>, vector<1x48x16xf32>
      %116 = vector.shape_cast %115 : vector<1x48x16xf32> to vector<48x16xf32>
      %c0_48 = arith.constant 0 : index
      %c0_49 = arith.constant 0 : index
      %117 = vector.load %arg10[%c0_48, %c0_49] : memref<48x16xf32, #tpu.memory_space<vmem>>, vector<48x16xf32>
      tpu.vector_store %arg10[%c0_48, %c0_49], %116 {strides = array<i32>} : memref<48x16xf32, #tpu.memory_space<vmem>>, vector<48x16xf32>,
    } else {
    }
    %c0_i32_13 = arith.constant 0 : i32
    %40 = arith.cmpi eq, %24, %c0_i32_13 : i32
    %41 = arith.extui %40 : i1 to i32
    %c0_i32_14 = arith.constant 0 : i32
    %42 = arith.cmpi ne, %41, %c0_i32_14 : i32
    scf.if %42 {
      %c0_46 = arith.constant 0 : index
      %c0_47 = arith.constant 0 : index
      %114 = vector.load %arg10[%c0_46, %c0_47] : memref<48x16xf32, #tpu.memory_space<vmem>>, vector<16x16xf32>
      %cst_48 = arith.constant 2.990000e-01 : f32
      %115 = vector.broadcast %cst_48 : f32 to vector<16x16xf32>
      %116 = arith.mulf %115, %114 : vector<16x16xf32>
      %c16_49 = arith.constant 16 : index
      %c0_50 = arith.constant 0 : index
      %117 = vector.load %arg10[%c16_49, %c0_50] : memref<48x16xf32, #tpu.memory_space<vmem>>, vector<16x16xf32>
      %cst_51 = arith.constant 5.870000e-01 : f32
      %118 = vector.broadcast %cst_51 : f32 to vector<16x16xf32>
      %119 = arith.mulf %118, %117 : vector<16x16xf32>
      %120 = arith.addf %116, %119 : vector<16x16xf32>
      %c32_52 = arith.constant 32 : index
      %c0_53 = arith.constant 0 : index
      %121 = vector.load %arg10[%c32_52, %c0_53] : memref<48x16xf32, #tpu.memory_space<vmem>>, vector<16x16xf32>
      %cst_54 = arith.constant 1.140000e-01 : f32
      %122 = vector.broadcast %cst_54 : f32 to vector<16x16xf32>
      %123 = arith.mulf %122, %121 : vector<16x16xf32>
      %124 = arith.addf %120, %123 : vector<16x16xf32>
      %c0_55 = arith.constant 0 : index
      %c0_56 = arith.constant 0 : index
      %125 = vector.load %arg10[%c0_55, %c0_56] : memref<48x16xf32, #tpu.memory_space<vmem>>, vector<16x16xf32>
      tpu.vector_store %arg10[%c0_55, %c0_56], %124 {strides = array<i32>} : memref<48x16xf32, #tpu.memory_space<vmem>>, vector<16x16xf32>,
      %c16_57 = arith.constant 16 : index
      %c0_58 = arith.constant 0 : index
      %126 = vector.load %arg10[%c16_57, %c0_58] : memref<48x16xf32, #tpu.memory_space<vmem>>, vector<16x16xf32>
      tpu.vector_store %arg10[%c16_57, %c0_58], %124 {strides = array<i32>} : memref<48x16xf32, #tpu.memory_space<vmem>>, vector<16x16xf32>,
      %c32_59 = arith.constant 32 : index
      %c0_60 = arith.constant 0 : index
      %127 = vector.load %arg10[%c32_59, %c0_60] : memref<48x16xf32, #tpu.memory_space<vmem>>, vector<16x16xf32>
      tpu.vector_store %arg10[%c32_59, %c0_60], %124 {strides = array<i32>} : memref<48x16xf32, #tpu.memory_space<vmem>>, vector<16x16xf32>,
    } else {
    }
    %c1_i32_15 = arith.constant 1 : i32
    %43 = arith.cmpi eq, %24, %c1_i32_15 : i32
    %44 = arith.extui %43 : i1 to i32
    %c0_i32_16 = arith.constant 0 : i32
    %45 = arith.cmpi ne, %44, %c0_i32_16 : i32
    scf.if %45 {
      %c0_46 = arith.constant 0 : index
      %c0_47 = arith.constant 0 : index
      %114 = vector.load %arg10[%c0_46, %c0_47] : memref<48x16xf32, #tpu.memory_space<vmem>>, vector<48x16xf32>
      %cst_48 = arith.constant 0.501960814 : f32
      %115 = vector.broadcast %cst_48 : f32 to vector<48x16xf32>
      %116 = arith.cmpf oge, %114, %115 : vector<48x16xf32>
      %cst_49 = arith.constant 1.000000e+00 : f32
      %117 = vector.broadcast %cst_49 : f32 to vector<48x16xf32>
      %118 = arith.subf %117, %114 : vector<48x16xf32>
      %119 = arith.select %116, %118, %114 : vector<48x16xi1>, vector<48x16xf32>
      %c0_50 = arith.constant 0 : index
      %c0_51 = arith.constant 0 : index
      %120 = vector.load %arg10[%c0_50, %c0_51] : memref<48x16xf32, #tpu.memory_space<vmem>>, vector<48x16xf32>
      tpu.vector_store %arg10[%c0_50, %c0_51], %119 {strides = array<i32>} : memref<48x16xf32, #tpu.memory_space<vmem>>, vector<48x16xf32>,
    } else {
    }
    %c2_i32 = arith.constant 2 : i32
    %46 = arith.cmpi eq, %24, %c2_i32 : i32
    %47 = arith.extui %46 : i1 to i32
    %c0_i32_17 = arith.constant 0 : i32
    %48 = arith.cmpi ne, %47, %c0_i32_17 : i32
    scf.if %48 {
      %c0_46 = arith.constant 0 : index
      %c0_47 = arith.constant 0 : index
      %114 = vector.load %arg10[%c0_46, %c0_47] : memref<48x16xf32, #tpu.memory_space<vmem>>, vector<48x16xf32>
      %115 = arith.truncf %114 : vector<48x16xf32> to vector<48x16xbf16>
      %c0_48 = arith.constant 0 : index
      %c0_49 = arith.constant 0 : index
      %116 = vector.load %arg7[%c0_48, %c0_49] : memref<16x16xbf16, #tpu.memory_space<vmem>>, vector<16x16xbf16>
      %117 = vector.extract_strided_slice %115 {offsets = [0, 0], sizes = [16, 16], strides = [1, 1]} : vector<48x16xbf16> to vector<16x16xbf16>
      %cst_50 = arith.constant dense<0.000000e+00> : vector<16x16xf32>
      %118 = tpu.matmul %116, %117, %cst_50 {dimension_numbers = #tpu.dot_dimension_numbers<[1], [0], [0], [1], [0, 0, 1, 1], [], []>} : vector<16x16xbf16>, vector<16x16xbf16>, vector<16x16xf32> -> vector<16x16xf32>
      %c0_51 = arith.constant 0 : index
      %c0_52 = arith.constant 0 : index
      %119 = vector.load %arg10[%c0_51, %c0_52] : memref<48x16xf32, #tpu.memory_space<vmem>>, vector<16x16xf32>
      tpu.vector_store %arg10[%c0_51, %c0_52], %118 {strides = array<i32>} : memref<48x16xf32, #tpu.memory_space<vmem>>, vector<16x16xf32>,
      %120 = vector.extract_strided_slice %115 {offsets = [16, 0], sizes = [16, 16], strides = [1, 1]} : vector<48x16xbf16> to vector<16x16xbf16>
      %cst_53 = arith.constant dense<0.000000e+00> : vector<16x16xf32>
      %121 = tpu.matmul %116, %120, %cst_53 {dimension_numbers = #tpu.dot_dimension_numbers<[1], [0], [0], [1], [0, 0, 1, 1], [], []>} : vector<16x16xbf16>, vector<16x16xbf16>, vector<16x16xf32> -> vector<16x16xf32>
      %c16_54 = arith.constant 16 : index
      %c0_55 = arith.constant 0 : index
      %122 = vector.load %arg10[%c16_54, %c0_55] : memref<48x16xf32, #tpu.memory_space<vmem>>, vector<16x16xf32>
      tpu.vector_store %arg10[%c16_54, %c0_55], %121 {strides = array<i32>} : memref<48x16xf32, #tpu.memory_space<vmem>>, vector<16x16xf32>,
      %123 = vector.extract_strided_slice %115 {offsets = [32, 0], sizes = [16, 16], strides = [1, 1]} : vector<48x16xbf16> to vector<16x16xbf16>
      %cst_56 = arith.constant dense<0.000000e+00> : vector<16x16xf32>
      %124 = tpu.matmul %116, %123, %cst_56 {dimension_numbers = #tpu.dot_dimension_numbers<[1], [0], [0], [1], [0, 0, 1, 1], [], []>} : vector<16x16xbf16>, vector<16x16xbf16>, vector<16x16xf32> -> vector<16x16xf32>
      %c32_57 = arith.constant 32 : index
      %c0_58 = arith.constant 0 : index
      %125 = vector.load %arg10[%c32_57, %c0_58] : memref<48x16xf32, #tpu.memory_space<vmem>>, vector<16x16xf32>
      tpu.vector_store %arg10[%c32_57, %c0_58], %124 {strides = array<i32>} : memref<48x16xf32, #tpu.memory_space<vmem>>, vector<16x16xf32>,
      %c0_59 = arith.constant 0 : index
      %c0_60 = arith.constant 0 : index
      %126 = vector.load %arg10[%c0_59, %c0_60] : memref<48x16xf32, #tpu.memory_space<vmem>>, vector<48x16xf32>
      %127 = arith.truncf %126 : vector<48x16xf32> to vector<48x16xbf16>
      %c0_61 = arith.constant 0 : index
      %c0_62 = arith.constant 0 : index
      %128 = vector.load %arg8[%c0_61, %c0_62] : memref<16x16xbf16, #tpu.memory_space<vmem>>, vector<16x16xbf16>
      %cst_63 = arith.constant dense<0.000000e+00> : vector<48x16xf32>
      %129 = tpu.matmul %127, %128, %cst_63 {dimension_numbers = #tpu.dot_dimension_numbers<[1], [0], [0], [1], [0, 0, 1, 1], [], []>} : vector<48x16xbf16>, vector<16x16xbf16>, vector<48x16xf32> -> vector<48x16xf32>
      %c0_64 = arith.constant 0 : index
      %c0_65 = arith.constant 0 : index
      %130 = vector.load %arg10[%c0_64, %c0_65] : memref<48x16xf32, #tpu.memory_space<vmem>>, vector<48x16xf32>
      tpu.vector_store %arg10[%c0_64, %c0_65], %129 {strides = array<i32>} : memref<48x16xf32, #tpu.memory_space<vmem>>, vector<48x16xf32>,
    } else {
    }
    %c0 = arith.constant 0 : index
    %c0_18 = arith.constant 0 : index
    %49 = vector.load %arg10[%c0, %c0_18] : memref<48x16xf32, #tpu.memory_space<vmem>>, vector<48x16xf32>
    %50 = vector.broadcast %27 : f32 to vector<48x16xf32>
    %51 = arith.mulf %49, %50 : vector<48x16xf32>
    %cst_19 = arith.constant 0.000000e+00 : f32
    %cst_20 = arith.constant 1.000000e+00 : f32
    %52 = vector.broadcast %cst_19 : f32 to vector<48x16xf32>
    %53 = arith.maximumf %52, %51 : vector<48x16xf32>
    %54 = vector.broadcast %cst_20 : f32 to vector<48x16xf32>
    %55 = arith.minimumf %54, %53 : vector<48x16xf32>
    %c0_21 = arith.constant 0 : index
    %c0_22 = arith.constant 0 : index
    %56 = vector.load %arg10[%c0_21, %c0_22] : memref<48x16xf32, #tpu.memory_space<vmem>>, vector<48x16xf32>
    tpu.vector_store %arg10[%c0_21, %c0_22], %55 {strides = array<i32>} : memref<48x16xf32, #tpu.memory_space<vmem>>, vector<48x16xf32>,
    %c0_23 = arith.constant 0 : index
    %c0_24 = arith.constant 0 : index
    %57 = vector.load %arg10[%c0_23, %c0_24] : memref<48x16xf32, #tpu.memory_space<vmem>>, vector<16x16xf32>
    %cst_25 = arith.constant 2.990000e-01 : f32
    %58 = vector.broadcast %cst_25 : f32 to vector<16x16xf32>
    %59 = arith.mulf %58, %57 : vector<16x16xf32>
    %c16 = arith.constant 16 : index
    %c0_26 = arith.constant 0 : index
    %60 = vector.load %arg10[%c16, %c0_26] : memref<48x16xf32, #tpu.memory_space<vmem>>, vector<16x16xf32>
    %cst_27 = arith.constant 5.870000e-01 : f32
    %61 = vector.broadcast %cst_27 : f32 to vector<16x16xf32>
    %62 = arith.mulf %61, %60 : vector<16x16xf32>
    %63 = arith.addf %59, %62 : vector<16x16xf32>
    %c32 = arith.constant 32 : index
    %c0_28 = arith.constant 0 : index
    %64 = vector.load %arg10[%c32, %c0_28] : memref<48x16xf32, #tpu.memory_space<vmem>>, vector<16x16xf32>
    %cst_29 = arith.constant 1.140000e-01 : f32
    %65 = vector.broadcast %cst_29 : f32 to vector<16x16xf32>
    %66 = arith.mulf %65, %64 : vector<16x16xf32>
    %67 = arith.addf %63, %66 : vector<16x16xf32>
    %68 = vector.shape_cast %67 : vector<16x16xf32> to vector<1x16x16xf32>
    %cst_30 = arith.constant dense<0.000000e+00> : vector<1xf32>
    %69 = vector.multi_reduction <add>, %68, %cst_30 [1, 2] : vector<1x16x16xf32> to vector<1xf32>
    %70 = vector.shape_cast %69 : vector<1xf32> to vector<1x1x1xf32>
    %71 = vector.extract %70[0, 0, 0] : f32 from vector<1x1x1xf32>
    %cst_31 = arith.constant 2.560000e+02 : f32
    %72 = arith.divf %71, %cst_31 : f32
    %c0_32 = arith.constant 0 : index
    %c0_33 = arith.constant 0 : index
    %73 = vector.load %arg10[%c0_32, %c0_33] : memref<48x16xf32, #tpu.memory_space<vmem>>, vector<48x16xf32>
    %74 = vector.broadcast %30 : f32 to vector<48x16xf32>
    %75 = arith.mulf %74, %73 : vector<48x16xf32>
    %cst_34 = arith.constant 1.000000e+00 : f32
    %76 = arith.subf %cst_34, %30 : f32
    %77 = arith.mulf %76, %72 : f32
    %78 = vector.broadcast %77 : f32 to vector<48x16xf32>
    %79 = arith.addf %75, %78 : vector<48x16xf32>
    %cst_35 = arith.constant 0.000000e+00 : f32
    %cst_36 = arith.constant 1.000000e+00 : f32
    %80 = vector.broadcast %cst_35 : f32 to vector<48x16xf32>
    %81 = arith.maximumf %80, %79 : vector<48x16xf32>
    %82 = vector.broadcast %cst_36 : f32 to vector<48x16xf32>
    %83 = arith.minimumf %82, %81 : vector<48x16xf32>
    %84 = vector.extract_strided_slice %83 {offsets = [0, 0], sizes = [16, 16], strides = [1, 1]} : vector<48x16xf32> to vector<16x16xf32>
    %cst_37 = arith.constant 2.990000e-01 : f32
    %85 = vector.broadcast %cst_37 : f32 to vector<16x16xf32>
    %86 = arith.mulf %85, %84 : vector<16x16xf32>
    %87 = vector.extract_strided_slice %83 {offsets = [16, 0], sizes = [16, 16], strides = [1, 1]} : vector<48x16xf32> to vector<16x16xf32>
    %cst_38 = arith.constant 5.870000e-01 : f32
    %88 = vector.broadcast %cst_38 : f32 to vector<16x16xf32>
    %89 = arith.mulf %88, %87 : vector<16x16xf32>
    %90 = arith.addf %86, %89 : vector<16x16xf32>
    %91 = vector.extract_strided_slice %83 {offsets = [32, 0], sizes = [16, 16], strides = [1, 1]} : vector<48x16xf32> to vector<16x16xf32>
    %cst_39 = arith.constant 1.140000e-01 : f32
    %92 = vector.broadcast %cst_39 : f32 to vector<16x16xf32>
    %93 = arith.mulf %92, %91 : vector<16x16xf32>
    %94 = arith.addf %90, %93 : vector<16x16xf32>
    %95 = tpu.concatenate %94, %94, %94 in 0 : vector<16x16xf32>, vector<16x16xf32>, vector<16x16xf32> -> vector<48x16xf32>
    %96 = vector.broadcast %33 : f32 to vector<48x16xf32>
    %97 = arith.mulf %96, %83 : vector<48x16xf32>
    %cst_40 = arith.constant 1.000000e+00 : f32
    %98 = arith.subf %cst_40, %33 : f32
    %99 = vector.broadcast %98 : f32 to vector<48x16xf32>
    %100 = arith.mulf %99, %95 : vector<48x16xf32>
    %101 = arith.addf %97, %100 : vector<48x16xf32>
    %cst_41 = arith.constant 0.000000e+00 : f32
    %cst_42 = arith.constant 1.000000e+00 : f32
    %102 = vector.broadcast %cst_41 : f32 to vector<48x16xf32>
    %103 = arith.maximumf %102, %101 : vector<48x16xf32>
    %104 = vector.broadcast %cst_42 : f32 to vector<48x16xf32>
    %105 = arith.minimumf %104, %103 : vector<48x16xf32>
    %106 = vector.broadcast %4 : vector<48x1xf32> to vector<48x16xf32>
    %107 = arith.subf %105, %106 : vector<48x16xf32>
    %108 = vector.broadcast %8 : vector<48x1xf32> to vector<48x16xf32>
    %109 = arith.mulf %107, %108 : vector<48x16xf32>
    %110 = arith.index_cast %18 : i32 to index
    %c0_43 = arith.constant 0 : index
    %c0_44 = arith.constant 0 : index
    %111 = vector.load %arg9[%110, %c0_43, %c0_44] : memref<1x48x16xf32, #tpu.memory_space<vmem>>, vector<1x48x16xf32>
    %112 = vector.shape_cast %111 : vector<1x48x16xf32> to vector<48x16xf32>
    %113 = vector.shape_cast %109 : vector<48x16xf32> to vector<1x48x16xf32>
    tpu.vector_store %arg9[%110, %c0_43, %c0_44], %113 {strides = array<i32>} : memref<1x48x16xf32, #tpu.memory_space<vmem>>, vector<1x48x16xf32>,
    %c1_i32_45 = arith.constant 1 : i32
    return
  }
  func.func @transform_0(%arg0: i32, %arg1: memref<2xi32, #tpu.memory_space<smem>>, %arg2: memref<2xi32, #tpu.memory_space<smem>>, %arg3: memref<2xf32, #tpu.memory_space<smem>>, %arg4: memref<2xf32, #tpu.memory_space<smem>>, %arg5: memref<2xf32, #tpu.memory_space<smem>>) -> (i32, i32, i32) {
    %c0_i32 = arith.constant 0 : i32
    %c0_i32_0 = arith.constant 0 : i32
    %c0_i32_1 = arith.constant 0 : i32
    return %arg0, %c0_i32, %c0_i32_0 : i32, i32, i32
  }
  func.func @transform_1(%arg0: i32, %arg1: memref<2xi32, #tpu.memory_space<smem>>, %arg2: memref<2xi32, #tpu.memory_space<smem>>, %arg3: memref<2xf32, #tpu.memory_space<smem>>, %arg4: memref<2xf32, #tpu.memory_space<smem>>, %arg5: memref<2xf32, #tpu.memory_space<smem>>) -> (i32, i32) {
    %c0_i32 = arith.constant 0 : i32
    %c0_i32_0 = arith.constant 0 : i32
    %c0_i32_1 = arith.constant 0 : i32
    return %c0_i32, %c0_i32_0 : i32, i32
  }
  func.func @transform_2(%arg0: i32, %arg1: memref<2xi32, #tpu.memory_space<smem>>, %arg2: memref<2xi32, #tpu.memory_space<smem>>, %arg3: memref<2xf32, #tpu.memory_space<smem>>, %arg4: memref<2xf32, #tpu.memory_space<smem>>, %arg5: memref<2xf32, #tpu.memory_space<smem>>) -> (i32, i32) {
    %c0_i32 = arith.constant 0 : i32
    %c0_i32_0 = arith.constant 0 : i32
    %c0_i32_1 = arith.constant 0 : i32
    return %c0_i32, %c0_i32_0 : i32, i32
  }
  func.func @transform_3(%arg0: i32, %arg1: memref<2xi32, #tpu.memory_space<smem>>, %arg2: memref<2xi32, #tpu.memory_space<smem>>, %arg3: memref<2xf32, #tpu.memory_space<smem>>, %arg4: memref<2xf32, #tpu.memory_space<smem>>, %arg5: memref<2xf32, #tpu.memory_space<smem>>) -> (i32, i32, i32) {
    %c0_i32 = arith.constant 0 : i32
    %c0_i32_0 = arith.constant 0 : i32
    %c0_i32_1 = arith.constant 0 : i32
    return %arg0, %c0_i32, %c0_i32_0 : i32, i32, i32
  }
}

</mosaic_0001>

<llo_original>
// kernel: tpu_custom_call.1
$region0: #{tpu_custom_call.1}
  #allocation0 [shape = 'u32[]', space=smem, size = 0x4, offset = 0x4, fixed_abs, tag = 'smem constant byte address 0x4 - core index']
  #allocation1 [shape = 'u32[144,128]{1,0:T(1,128)}', space=vmem, size = 0x12000, scoped, tag = 'internal scratch']
  #allocation2 [shape = 'f32[48,16]{1,0:T(8,128)}', space=vmem, size = 0x6000, scoped, tag = 'scratch operand']
  #allocation3 [shape = 's32[1]{0}', space=sflag, size = 0x4, scoped, tag = 'scoped memory for tpu_custom_call.1']
  #allocation4 [shape = 'u8[512]{0}', space=smem, size = 0x200, scoped, tag = 'prefetched SMEM operand 0']
  #allocation5 [shape = 'u8[512]{0}', space=smem, size = 0x200, scoped, tag = 'prefetched SMEM operand 1']
  #allocation6 [shape = 'u8[512]{0}', space=smem, size = 0x200, scoped, tag = 'prefetched SMEM operand 2']
  #allocation7 [shape = 'u8[512]{0}', space=smem, size = 0x200, scoped, tag = 'prefetched SMEM operand 3']
  #allocation8 [shape = 'u8[512]{0}', space=smem, size = 0x200, scoped, tag = 'prefetched SMEM operand 4']
  %s0 = inlined_call_operand.vmem [shape: s32[2], index: 0, kind: input, shape index: {}]
  %s1 = inlined_call_operand.vmem [shape: s32[2], index: 1, kind: input, shape index: {}]
  %s2 = inlined_call_operand.vmem [shape: f32[2], index: 2, kind: input, shape index: {}]
  %s3 = inlined_call_operand.vmem [shape: f32[2], index: 3, kind: input, shape index: {}]
  %s4 = inlined_call_operand.vmem [shape: f32[2], index: 4, kind: input, shape index: {}]
  %s5 = inlined_call_operand.vmem [shape: f32[2,48,16], index: 5, kind: input, shape index: {}]
  %s6 = inlined_call_operand.vmem [shape: bf16[16,16], index: 6, kind: input, shape index: {}]
  %s7 = inlined_call_operand.vmem [shape: bf16[16,16], index: 7, kind: input, shape index: {}]
  %s8 = inlined_call_operand.vmem [shape: f32[2,48,16], index: 8, kind: output, shape index: {}]
  %s9 = sld [smem:[#allocation0]]
  $region65: #{tpu_custom_call.1} parent=0
    _
  %s11 = ssub.s32 1, %s9
  %s12 = scalar_select 0, %s11, %s9
  %s13 = sshll.u32 %s0, 4
  %s14 = int_to_ptr.vmem [resolvable:$true] %s13
  %16 = dma.vmem_to_smem %s14, 16, [#allocation4], [#allocation3]
  %s17 = sshll.u32 %s1, 4
  %s18 = int_to_ptr.vmem [resolvable:$true] %s17
  %20 = dma.vmem_to_smem %s18, 16, [#allocation5], [#allocation3]
  %s21 = sshll.u32 %s2, 4
  %s22 = int_to_ptr.vmem [resolvable:$true] %s21
  %24 = dma.vmem_to_smem %s22, 16, [#allocation6], [#allocation3]
  %s25 = sshll.u32 %s3, 4
  %s26 = int_to_ptr.vmem [resolvable:$true] %s25
  %28 = dma.vmem_to_smem %s26, 16, [#allocation7], [#allocation3]
  %s29 = sshll.u32 %s4, 4
  %s30 = int_to_ptr.vmem [resolvable:$true] %s29
  %32 = dma.vmem_to_smem %s30, 16, [#allocation8], [#allocation3]
  %33 = dma.done [#allocation3], 80
  %34 = sfence
  loop: start=0, step=1, limit=4
  $region2: #{tpu_custom_call.1} parent=0 // loop_pre_header
    _
  $region3: #{tpu_custom_call.1} parent=0 // loop_header
    %s36 = sphi 0, %s40
    %p37 = scmp.ge.s32.totalorder %s36, 4
    %s46 = sphi 0, %s48
    %s49 = sphi 0, %s46
    %s50 = sphi 0, %s49
    %s66 = sphi 0, %s50
    %s70 = sphi 0, %s70
    %s72 = sphi 0, %s70
    %s73 = sphi 0, %s72
    %s87 = sphi 0, %s73
    %s91 = sphi 0, %s91
    %s93 = sphi 0, %s91
    %s94 = sphi 0, %s93
    %s108 = sphi 0, %s94
    %s114 = sphi 0, %s116
    %s117 = sphi 0, %s114
    %s118 = sphi 0, %s117
    %s134 = sphi 0, %s118
  $region4: #{tpu_custom_call.1} parent=0 // loop_header_branch
    %39 = sbr.rel (%p37) target = $region8
  $region5: #{tpu_custom_call.1} parent=0 // loop_body
    %s41 = ssub.s32 %s36, 1
    %s42 = ssub.s32 %s36, 2
    %s43 = sadd.s32 %s36, 1
    %s44 = ssub.s32 %s36, %s43
    %p45 = scmp.eq.s32.totalorder %s44, 0
    %s47 = sadd.s32 %s46, 1
    %s48 = scalar_select %p45, %s46, %s47
    %p51 = pneg %p45
    %p52 = scmp.eq.s32.totalorder %s36, 1
    %p53 = por %p51, %p52
    %p54 = scmp.ne.s32.totalorder %s46, %s49
    %p55 = scmp.eq.s32.totalorder %s36, 0
    %p56 = por %p54, %p55
    %p57 = scmp.ne.s32.totalorder %s46, %s49
    %p58 = scmp.eq.s32.totalorder %s41, 1
    %p59 = por %p57, %p58
    %p60 = scmp.ne.s32.totalorder %s49, %s50
    %p61 = scmp.eq.s32.totalorder %s41, 0
    %p62 = por %p60, %p61
    %p63 = scmp.ne.s32.totalorder %s49, %s50
    %p64 = scmp.eq.s32.totalorder %s42, 1
    %p65 = por %p63, %p64
    %p67 = scmp.ne.s32.totalorder %s50, %s66
    %p68 = scmp.eq.s32.totalorder %s42, 0
    %p69 = por %p67, %p68
    %s71 = sadd.s32 %s70, 1
    %p74 = scmp.eq.s32.totalorder %s36, 1
    %p75 = scmp.ne.s32.totalorder %s70, %s72
    %p76 = scmp.eq.s32.totalorder %s36, 0
    %p77 = por %p75, %p76
    %p78 = scmp.ne.s32.totalorder %s70, %s72
    %p79 = scmp.eq.s32.totalorder %s41, 1
    %p80 = por %p78, %p79
    %p81 = scmp.ne.s32.totalorder %s72, %s73
    %p82 = scmp.eq.s32.totalorder %s41, 0
    %p83 = por %p81, %p82
    %p84 = scmp.ne.s32.totalorder %s72, %s73
    %p85 = scmp.eq.s32.totalorder %s42, 1
    %p86 = por %p84, %p85
    %p88 = scmp.ne.s32.totalorder %s73, %s87
    %p89 = scmp.eq.s32.totalorder %s42, 0
    %p90 = por %p88, %p89
    %s92 = sadd.s32 %s91, 1
    %p95 = scmp.eq.s32.totalorder %s36, 1
    %p96 = scmp.ne.s32.totalorder %s91, %s93
    %p97 = scmp.eq.s32.totalorder %s36, 0
    %p98 = por %p96, %p97
    %p99 = scmp.ne.s32.totalorder %s91, %s93
    %p100 = scmp.eq.s32.totalorder %s41, 1
    %p101 = por %p99, %p100
    %p102 = scmp.ne.s32.totalorder %s93, %s94
    %p103 = scmp.eq.s32.totalorder %s41, 0
    %p104 = por %p102, %p103
    %p105 = scmp.ne.s32.totalorder %s93, %s94
    %p106 = scmp.eq.s32.totalorder %s42, 1
    %p107 = por %p105, %p106
    %p109 = scmp.ne.s32.totalorder %s94, %s108
    %p110 = scmp.eq.s32.totalorder %s42, 0
    %p111 = por %p109, %p110
    %s112 = ssub.s32 %s36, %s43
    %p113 = scmp.eq.s32.totalorder %s112, 0
    %s115 = sadd.s32 %s114, 1
    %s116 = scalar_select %p113, %s114, %s115
    %p119 = pneg %p113
    %p120 = scmp.eq.s32.totalorder %s36, 1
    %p121 = por %p119, %p120
    %p122 = scmp.ne.s32.totalorder %s114, %s117
    %p123 = scmp.eq.s32.totalorder %s36, 0
    %p124 = por %p122, %p123
    %p125 = scmp.ne.s32.totalorder %s114, %s117
    %p126 = scmp.eq.s32.totalorder %s41, 1
    %p127 = por %p125, %p126
    %p128 = scmp.ne.s32.totalorder %s117, %s118
    %p129 = scmp.eq.s32.totalorder %s41, 0
    %p130 = por %p128, %p129
    %p131 = scmp.ne.s32.totalorder %s117, %s118
    %p132 = scmp.eq.s32.totalorder %s42, 1
    %p133 = por %p131, %p132
    %p135 = scmp.ne.s32.totalorder %s118, %s134
    %p136 = scmp.eq.s32.totalorder %s42, 0
    %p137 = por %p135, %p136
    %p138 = scmp.le.s32.totalorder 1, %s36
    %p139 = scmp.lt.s32.totalorder %s36, 3
    %p140 = pnand %p138, %p139
    %p141 = pneg %p140
    // Predicated region
    $region9: #{tpu_custom_call.1} parent=5 // pred_check
      _
    $region10: #{tpu_custom_call.1} parent=5 // pred_check_branch
      %143 = sbr.rel (%p140) target = $region12
    $region11: #{tpu_custom_call.1} parent=5 // pred_region
      %s144 = ssub.s32 %s36, 1
      // Predicated region
      $region13: #{tpu_custom_call.1} parent=11 // pred_check
        %p145 = pneg %p83
      $region14: #{tpu_custom_call.1} parent=11 // pred_check_branch
        %147 = sbr.rel (%p145) target = $region16
      $region15: #{tpu_custom_call.1} parent=11 // pred_region
        _
      $region16: #{tpu_custom_call.1} parent=11 // pred_fallthru
        _
      // Predicated region
      $region17: #{tpu_custom_call.1} parent=11 // pred_check
        %p148 = pneg %p104
      $region18: #{tpu_custom_call.1} parent=11 // pred_check_branch
        %150 = sbr.rel (%p148) target = $region20
      $region19: #{tpu_custom_call.1} parent=11 // pred_region
        _
      $region20: #{tpu_custom_call.1} parent=11 // pred_fallthru
        _
    $region12: #{tpu_custom_call.1} parent=5 // pred_fallthru
      _
    %p151 = scmp.lt.s32.totalorder %s36, 2
    // Predicated region
    $region21: #{tpu_custom_call.1} parent=5 // pred_check
      %p152 = pneg %p151
    $region22: #{tpu_custom_call.1} parent=5 // pred_check_branch
      %154 = sbr.rel (%p152) target = $region24
    $region23: #{tpu_custom_call.1} parent=5 // pred_region
      // Predicated region
      $region25: #{tpu_custom_call.1} parent=23 // pred_check
        %p155 = pneg %p56
      $region26: #{tpu_custom_call.1} parent=23 // pred_check_branch
        %157 = sbr.rel (%p155) target = $region28
      $region27: #{tpu_custom_call.1} parent=23 // pred_region
        %p158 = scmp.lt.s32.totalorder %s36, 1
        %s159 = scalar_select %p158, %s36, 1
        %s160 = smul.addr %s159, 6
        %s161 = smul.addr %s160, 8
        %s162 = scalar_lea.vmem %s5, %s161
      $region28: #{tpu_custom_call.1} parent=23 // pred_fallthru
        _
    $region24: #{tpu_custom_call.1} parent=5 // pred_fallthru
      _
    %p163 = scmp.le.s32.totalorder 1, %s36
    %p164 = scmp.lt.s32.totalorder %s36, 3
    %p165 = pnand %p163, %p164
    %p166 = pneg %p165
    // Predicated region
    $region29: #{tpu_custom_call.1} parent=5 // pred_check
      _
    $region30: #{tpu_custom_call.1} parent=5 // pred_check_branch
      %168 = sbr.rel (%p165) target = $region32
    $region31: #{tpu_custom_call.1} parent=5 // pred_region
      %s169 = ssub.s32 %s36, 1
      %p170 = scmp.lt.s32.totalorder %s41, 1
      %s171 = scalar_select %p170, %s41, 1
      %s172 = smul.addr %s171, 6
      %s173 = smul.addr %s172, 8
      %s174 = scalar_lea.vmem %s5, %s173
      %p175 = pneg %p62
      %p176 = pneg %p59
      %p177 = pneg %p83
      %p178 = pneg %p80
      %p179 = pneg %p104
      %p180 = pneg %p101
      %p181 = pneg %p130
      %p182 = pneg %p127
      %p183 = scmp.lt.s32.totalorder %s41, 1
      %s184 = scalar_select %p183, %s41, 1
      %s185 = smul.addr %s184, 6
      %s186 = smul.addr %s185, 8
      %s187 = scalar_lea.vmem %s8, %s186
      %p188 = scmp.lt.s32.totalorder %s41, 1
      %s189 = scalar_select %p188, %s41, 1
      %s190 = smul.addr %s189, 6
      %s191 = smul.addr %s190, 8
      %s192 = scalar_lea.vmem %s5, %s191
      %p193 = scmp.lt.s32.totalorder %s41, 1
      %s194 = scalar_select %p193, %s41, 1
      %s195 = smul.addr %s194, 6
      %s196 = smul.addr %s195, 8
      %s197 = scalar_lea.vmem %s8, %s196
      %v199 = vlaneseq
      %v200 = vshrl.u32 %v199, 7
      %v201 = vadd.s32 %v200, 8
      %v202 = vlaneseq
      %v203 = vand.u32 %v202, 127
      %v204 = vadd.s32 %v200, %v203
      %v205 = vadd.s32 %v201, %v203
      %vm206 = vcmp.eq.s32.totalorder %v204, 15
      %vm207 = vcmp.eq.s32.totalorder %v205, 15
      %v208 = vsel %vm206, 1.0, 0.0
      %v209 = vsel %vm207, 1.0, 0.0
      %s210 = sld [smem:[#allocation4 + %s41]]
      %s211 = sld [smem:[#allocation5 + %s41]]
      %s212 = sld [smem:[#allocation6 + %s41]]
      %s213 = sld [smem:[#allocation7 + %s41]]
      %s214 = sld [smem:[#allocation8 + %s41]]
      %p215 = scmp.ne.s32.totalorder %s210, 0
      // Predicated region
      $region33: #{tpu_custom_call.1} parent=31 // pred_check
        %p216 = pneg %p215
      $region34: #{tpu_custom_call.1} parent=31 // pred_check_branch
        %218 = sbr.rel (%p216) target = $region36
      $region35: #{tpu_custom_call.1} parent=31 // pred_region
        %v219 = vld [vmem:[%s192] sm:$0xff]
        %v220 = vld [vmem:[%s192 + $0x8] sm:$0xff]
        %v221 = vld [vmem:[%s192 + $0x10] sm:$0xff]
        %v222 = vld [vmem:[%s192 + $0x18] sm:$0xff]
        %v223 = vld [vmem:[%s192 + $0x20] sm:$0xff]
        %v224 = vld [vmem:[%s192 + $0x28] sm:$0xff]
        %vm225 = vcmask 130048
        %v227 = vsel %vm225, %v219, 0
        %v230 = vsel %vm225, %v220, 0
        %v233 = vsel %vm225, %v221, 0
        %v236 = vsel %vm225, %v222, 0
        %v239 = vsel %vm225, %v223, 0
        %v242 = vsel %vm225, %v224, 0
        %244 = vmatprep.subr.mxu0 0.0
        %245 = vmatpush1.msra.mxu0 0.0
        %246 = vmatprep.subr.mxu0 0.0
        %247 = vmatpush1.msra.mxu0 0.0
        %248 = vmatprep.subr.mxu0 0.0
        %249 = vmatpush1.msra.mxu0 0.0
        %250 = vmatprep.subr.mxu0 0.0
        %251 = vmatpush1.msra.mxu0 0.0
        %252 = vmatprep.subr.mxu0 0.0
        %253 = vmatpush1.msra.mxu0 0.0
        %254 = vmatprep.subr.mxu0 0.0
        %255 = vmatpush1.msra.mxu0 0.0
        %256 = vmatprep.subr.mxu0 0.0
        %257 = vmatpush1.msra.mxu0 0.0
        %258 = vmatprep.subr.mxu0 0.0
        %259 = vmatpush1.msra.mxu0 0.0
        %260 = vmatprep.subr.mxu0 0.0
        %261 = vmatpush1.msra.mxu0 0.0
        %262 = vmatprep.subr.mxu0 0.0
        %263 = vmatpush1.msra.mxu0 0.0
        %264 = vmatprep.subr.mxu0 0.0
        %265 = vmatpush1.msra.mxu0 0.0
        %266 = vmatprep.subr.mxu0 0.0
        %267 = vmatpush1.msra.mxu0 0.0
        %268 = vmatprep.subr.mxu0 0.0
        %269 = vmatpush1.msra.mxu0 0.0
        %270 = vmatprep.subr.mxu0 0.0
        %271 = vmatpush1.msra.mxu0 0.0
        %272 = vmatprep.subr.mxu0 0.0
        %273 = vmatpush1.msra.mxu0 %v209
        %274 = vmatprep.subr.mxu0 0.0
        %275 = vmatpush1.msra.mxu0 %v208
        %276 = vmatprep.subr.mxu0 0.0
        %277 = vmatpush2.msra.mxu0 0.0
        %278 = vmatprep.subr.mxu0 0.0
        %279 = vmatpush2.msra.mxu0 0.0
        %280 = vmatprep.subr.mxu0 0.0
        %281 = vmatpush2.msra.mxu0 0.0
        %282 = vmatprep.subr.mxu0 0.0
        %283 = vmatpush2.msra.mxu0 0.0
        %284 = vmatprep.subr.mxu0 0.0
        %285 = vmatpush2.msra.mxu0 0.0
        %286 = vmatprep.subr.mxu0 0.0
        %287 = vmatpush2.msra.mxu0 0.0
        %288 = vmatprep.subr.mxu0 0.0
        %289 = vmatpush2.msra.mxu0 0.0
        %290 = vmatprep.subr.mxu0 0.0
        %291 = vmatpush2.msra.mxu0 0.0
        %292 = vmatprep.subr.mxu0 0.0
        %293 = vmatpush2.msra.mxu0 0.0
        %294 = vmatprep.subr.mxu0 0.0
        %295 = vmatpush2.msra.mxu0 0.0
        %296 = vmatprep.subr.mxu0 0.0
        %297 = vmatpush2.msra.mxu0 0.0
        %298 = vmatprep.subr.mxu0 0.0
        %299 = vmatpush2.msra.mxu0 0.0
        %300 = vmatprep.subr.mxu0 0.0
        %301 = vmatpush2.msra.mxu0 0.0
        %302 = vmatprep.subr.mxu0 0.0
        %303 = vmatpush2.msra.mxu0 0.0
        %304 = vmatprep.subr.mxu0 0.0
        %305 = vmatpush2.msra.mxu0 0.0
        %306 = vmatprep.subr.mxu0 0.0
        %307 = vmatpush2.msra.mxu0 0.0
        %308 = vmatprep.mubr.f32.mxu0 0.0
        %309 = vmatmul.mubr.f32.gmra.mxu0 %v227
        %v310 = vpop.f32.mrf.mxu0
        %v311 = vadd.f32 0.0, %v310
        %v312 = vpop.f32.mrf.mxu0
        %313 = vmatprep.mubr.f32.mxu0 0.0
        %314 = vmatmul.mubr.f32.gmra.mxu0 %v230
        %v315 = vpop.f32.mrf.mxu0
        %v316 = vadd.f32 0.0, %v315
        %v317 = vpop.f32.mrf.mxu0
        %318 = vmatprep.mubr.f32.mxu0 0.0
        %319 = vmatmul.mubr.f32.gmra.mxu0 %v233
        %v320 = vpop.f32.mrf.mxu0
        %v321 = vadd.f32 0.0, %v320
        %v322 = vpop.f32.mrf.mxu0
        %323 = vmatprep.mubr.f32.mxu0 0.0
        %324 = vmatmul.mubr.f32.gmra.mxu0 %v236
        %v325 = vpop.f32.mrf.mxu0
        %v326 = vadd.f32 0.0, %v325
        %v327 = vpop.f32.mrf.mxu0
        %328 = vmatprep.mubr.f32.mxu0 0.0
        %329 = vmatmul.mubr.f32.gmra.mxu0 %v239
        %v330 = vpop.f32.mrf.mxu0
        %v331 = vadd.f32 0.0, %v330
        %v332 = vpop.f32.mrf.mxu0
        %333 = vmatprep.mubr.f32.mxu0 0.0
        %334 = vmatmul.mubr.f32.gmra.mxu0 %v242
        %v335 = vpop.f32.mrf.mxu0
        %v336 = vadd.f32 0.0, %v335
        %v337 = vpop.f32.mrf.mxu0
        %338 = vdwg.mxu0
        %339 = vst.msk [vmem:[#allocation2] sm:$0xff] %vm225, %v311
        %340 = vst.msk [vmem:[#allocation2 + $0x8] sm:$0xff] %vm225, %v316
        %341 = vst.msk [vmem:[#allocation2 + $0x10] sm:$0xff] %vm225, %v321
        %342 = vst.msk [vmem:[#allocation2 + $0x18] sm:$0xff] %vm225, %v326
        %343 = vst.msk [vmem:[#allocation2 + $0x20] sm:$0xff] %vm225, %v331
        %344 = vst.msk [vmem:[#allocation2 + $0x28] sm:$0xff] %vm225, %v336
      $region36: #{tpu_custom_call.1} parent=31 // pred_fallthru
        _
      %p345 = scmp.eq.s32.totalorder %s210, 0
      // Predicated region
      $region37: #{tpu_custom_call.1} parent=31 // pred_check
        %p346 = pneg %p345
      $region38: #{tpu_custom_call.1} parent=31 // pred_check_branch
        %348 = sbr.rel (%p346) target = $region40
      $region39: #{tpu_custom_call.1} parent=31 // pred_region
        %v349 = vld [vmem:[%s192] sm:$0xff]
        %v350 = vld [vmem:[%s192 + $0x8] sm:$0xff]
        %v351 = vld [vmem:[%s192 + $0x10] sm:$0xff]
        %v352 = vld [vmem:[%s192 + $0x18] sm:$0xff]
        %v353 = vld [vmem:[%s192 + $0x20] sm:$0xff]
        %v354 = vld [vmem:[%s192 + $0x28] sm:$0xff]
        %vm355 = vcmask 130048
        %356 = vst.msk [vmem:[#allocation2] sm:$0xff] %vm355, %v349
        %357 = vst.msk [vmem:[#allocation2 + $0x8] sm:$0xff] %vm355, %v350
        %358 = vst.msk [vmem:[#allocation2 + $0x10] sm:$0xff] %vm355, %v351
        %359 = vst.msk [vmem:[#allocation2 + $0x18] sm:$0xff] %vm355, %v352
        %360 = vst.msk [vmem:[#allocation2 + $0x20] sm:$0xff] %vm355, %v353
        %361 = vst.msk [vmem:[#allocation2 + $0x28] sm:$0xff] %vm355, %v354
      $region40: #{tpu_custom_call.1} parent=31 // pred_fallthru
        _
      %p362 = scmp.eq.s32.totalorder %s211, 0
      // Predicated region
      $region41: #{tpu_custom_call.1} parent=31 // pred_check
        %p363 = pneg %p362
      $region42: #{tpu_custom_call.1} parent=31 // pred_check_branch
        %365 = sbr.rel (%p363) target = $region44
      $region43: #{tpu_custom_call.1} parent=31 // pred_region
        %v366 = vld [vmem:[#allocation2] sm:$0xff]
        %v367 = vld [vmem:[#allocation2 + $0x8] sm:$0xff]
        %v368 = vmul.f32 %v366, 0.299
        %v369 = vmul.f32 %v367, 0.299
        %v370 = vld [vmem:[#allocation2 + $0x10] sm:$0xff]
        %v371 = vld [vmem:[#allocation2 + $0x18] sm:$0xff]
        %v372 = vmul.f32 %v370, 0.587
        %v373 = vmul.f32 %v371, 0.587
        %v374 = vadd.f32 %v368, %v372
        %v375 = vadd.f32 %v369, %v373
        %v376 = vld [vmem:[#allocation2 + $0x20] sm:$0xff]
        %v377 = vld [vmem:[#allocation2 + $0x28] sm:$0xff]
        %v378 = vmul.f32 %v376, 0.114
        %v379 = vmul.f32 %v377, 0.114
        %v380 = vadd.f32 %v374, %v378
        %v381 = vadd.f32 %v375, %v379
        %vm382 = vcmask 130048
        %383 = vst.msk [vmem:[#allocation2] sm:$0xff] %vm382, %v380
        %384 = vst.msk [vmem:[#allocation2 + $0x8] sm:$0xff] %vm382, %v381
        %385 = vst.msk [vmem:[#allocation2 + $0x10] sm:$0xff] %vm382, %v380
        %386 = vst.msk [vmem:[#allocation2 + $0x18] sm:$0xff] %vm382, %v381
        %387 = vst.msk [vmem:[#allocation2 + $0x20] sm:$0xff] %vm382, %v380
        %388 = vst.msk [vmem:[#allocation2 + $0x28] sm:$0xff] %vm382, %v381
      $region44: #{tpu_custom_call.1} parent=31 // pred_fallthru
        _
      %p389 = scmp.eq.s32.totalorder %s211, 1
      // Predicated region
      $region45: #{tpu_custom_call.1} parent=31 // pred_check
        %p390 = pneg %p389
      $region46: #{tpu_custom_call.1} parent=31 // pred_check_branch
        %392 = sbr.rel (%p390) target = $region48
      $region47: #{tpu_custom_call.1} parent=31 // pred_region
        %v393 = vld [vmem:[#allocation2] sm:$0xff]
        %v394 = vld [vmem:[#allocation2 + $0x8] sm:$0xff]
        %v395 = vld [vmem:[#allocation2 + $0x10] sm:$0xff]
        %v396 = vld [vmem:[#allocation2 + $0x18] sm:$0xff]
        %v397 = vld [vmem:[#allocation2 + $0x20] sm:$0xff]
        %v398 = vld [vmem:[#allocation2 + $0x28] sm:$0xff]
        %vm399 = vcmp.ge.f32.partialorder %v393, 0.5019608
        %vm400 = vcmp.ge.f32.partialorder %v394, 0.5019608
        %vm401 = vcmp.ge.f32.partialorder %v395, 0.5019608
        %vm402 = vcmp.ge.f32.partialorder %v396, 0.5019608
        %vm403 = vcmp.ge.f32.partialorder %v397, 0.5019608
        %vm404 = vcmp.ge.f32.partialorder %v398, 0.5019608
        %v405 = vsub.f32 1.0, %v393
        %v406 = vsub.f32 1.0, %v394
        %v407 = vsub.f32 1.0, %v395
        %v408 = vsub.f32 1.0, %v396
        %v409 = vsub.f32 1.0, %v397
        %v410 = vsub.f32 1.0, %v398
        %v411 = vsel %vm399, %v405, %v393
        %v412 = vsel %vm400, %v406, %v394
        %v413 = vsel %vm401, %v407, %v395
        %v414 = vsel %vm402, %v408, %v396
        %v415 = vsel %vm403, %v409, %v397
        %v416 = vsel %vm404, %v410, %v398
        %vm417 = vcmask 130048
        %418 = vst.msk [vmem:[#allocation2] sm:$0xff] %vm417, %v411
        %419 = vst.msk [vmem:[#allocation2 + $0x8] sm:$0xff] %vm417, %v412
        %420 = vst.msk [vmem:[#allocation2 + $0x10] sm:$0xff] %vm417, %v413
        %421 = vst.msk [vmem:[#allocation2 + $0x18] sm:$0xff] %vm417, %v414
        %422 = vst.msk [vmem:[#allocation2 + $0x20] sm:$0xff] %vm417, %v415
        %423 = vst.msk [vmem:[#allocation2 + $0x28] sm:$0xff] %vm417, %v416
      $region48: #{tpu_custom_call.1} parent=31 // pred_fallthru
        _
      %p424 = scmp.eq.s32.totalorder %s211, 2
      // Predicated region
      $region49: #{tpu_custom_call.1} parent=31 // pred_check
        %p425 = pneg %p424
      $region50: #{tpu_custom_call.1} parent=31 // pred_check_branch
        %427 = sbr.rel (%p425) target = $region52
      $region51: #{tpu_custom_call.1} parent=31 // pred_region
        %v428 = vld [vmem:[#allocation2] sm:$0xff]
        %v429 = vld [vmem:[#allocation2 + $0x8] sm:$0xff]
        %v430 = vld [vmem:[#allocation2 + $0x10] sm:$0xff]
        %v431 = vld [vmem:[#allocation2 + $0x18] sm:$0xff]
        %v432 = vld [vmem:[#allocation2 + $0x20] sm:$0xff]
        %v433 = vld [vmem:[#allocation2 + $0x28] sm:$0xff]
        %v434 = vpack.c.bf16 %v429, %v428
        %v435 = vpack.c.bf16 %v431, %v430
        %v436 = vpack.c.bf16 %v433, %v432
        %v437 = vld [vmem:[%s6] sm:$0xf]
        %v438 = vld [vmem:[%s6 + $0x4] sm:$0xf]
        %v441 = vunpack.c.l.b16 %v437
        %v442 = vunpack.c.l.b16 %v438
        %v443 = vpack.c.b16 %v442, %v441
        %vm444 = vcmask 130048
        %v446 = vsel %vm444, %v443, 0
        %448 = vmatprep.subr.bf16.mxu0 0
        %449 = vmatpush1.bf16.msra.mxu0 0
        %450 = vmatprep.subr.bf16.mxu0 0
        %451 = vmatpush1.bf16.msra.mxu0 0
        %452 = vmatprep.subr.bf16.mxu0 0
        %453 = vmatpush1.bf16.msra.mxu0 0
        %454 = vmatprep.subr.bf16.mxu0 0
        %455 = vmatpush1.bf16.msra.mxu0 0
        %456 = vmatprep.subr.bf16.mxu0 0
        %457 = vmatpush1.bf16.msra.mxu0 0
        %458 = vmatprep.subr.bf16.mxu0 0
        %459 = vmatpush1.bf16.msra.mxu0 0
        %460 = vmatprep.subr.bf16.mxu0 0
        %461 = vmatpush1.bf16.msra.mxu0 0
        %462 = vmatprep.subr.bf16.mxu0 0
        %463 = vmatpush1.bf16.msra.mxu0 %v434
        %464 = vmatprep.subr.bf16.mxu0 0
        %465 = vmatpush2.bf16.msra.mxu0 0
        %466 = vmatprep.subr.bf16.mxu0 0
        %467 = vmatpush2.bf16.msra.mxu0 0
        %468 = vmatprep.subr.bf16.mxu0 0
        %469 = vmatpush2.bf16.msra.mxu0 0
        %470 = vmatprep.subr.bf16.mxu0 0
        %471 = vmatpush2.bf16.msra.mxu0 0
        %472 = vmatprep.subr.bf16.mxu0 0
        %473 = vmatpush2.bf16.msra.mxu0 0
        %474 = vmatprep.subr.bf16.mxu0 0
        %475 = vmatpush2.bf16.msra.mxu0 0
        %476 = vmatprep.subr.bf16.mxu0 0
        %477 = vmatpush2.bf16.msra.mxu0 0
        %478 = vmatprep.subr.bf16.mxu0 0
        %479 = vmatpush2.bf16.msra.mxu0 0
        %480 = vmatprep.mubr.bf16.mxu0 0
        %481 = vmatmul.mubr.bf16.gmra.mxu0 %v446
        %v482 = vpop.f32.mrf.mxu0
        %v483 = vadd.f32 0.0, %v482
        %v484 = vpop.f32.mrf.mxu0
        %v485 = vpop.f32.mrf.mxu0
        %v486 = vadd.f32 0.0, %v485
        %v487 = vpop.f32.mrf.mxu0
        %488 = vdwg.mxu0
        %489 = vst.msk [vmem:[#allocation2] sm:$0xff] %vm444, %v483
        %490 = vst.msk [vmem:[#allocation2 + $0x8] sm:$0xff] %vm444, %v486
        %491 = vmatprep.subr.bf16.mxu0 0
        %492 = vmatpush1.bf16.msra.mxu0 0
        %493 = vmatprep.subr.bf16.mxu0 0
        %494 = vmatpush1.bf16.msra.mxu0 0
        %495 = vmatprep.subr.bf16.mxu0 0
        %496 = vmatpush1.bf16.msra.mxu0 0
        %497 = vmatprep.subr.bf16.mxu0 0
        %498 = vmatpush1.bf16.msra.mxu0 0
        %499 = vmatprep.subr.bf16.mxu0 0
        %500 = vmatpush1.bf16.msra.mxu0 0
        %501 = vmatprep.subr.bf16.mxu0 0
        %502 = vmatpush1.bf16.msra.mxu0 0
        %503 = vmatprep.subr.bf16.mxu0 0
        %504 = vmatpush1.bf16.msra.mxu0 0
        %505 = vmatprep.subr.bf16.mxu0 0
        %506 = vmatpush1.bf16.msra.mxu0 %v435
        %507 = vmatprep.subr.bf16.mxu0 0
        %508 = vmatpush2.bf16.msra.mxu0 0
        %509 = vmatprep.subr.bf16.mxu0 0
        %510 = vmatpush2.bf16.msra.mxu0 0
        %511 = vmatprep.subr.bf16.mxu0 0
        %512 = vmatpush2.bf16.msra.mxu0 0
        %513 = vmatprep.subr.bf16.mxu0 0
        %514 = vmatpush2.bf16.msra.mxu0 0
        %515 = vmatprep.subr.bf16.mxu0 0
        %516 = vmatpush2.bf16.msra.mxu0 0
        %517 = vmatprep.subr.bf16.mxu0 0
        %518 = vmatpush2.bf16.msra.mxu0 0
        %519 = vmatprep.subr.bf16.mxu0 0
        %520 = vmatpush2.bf16.msra.mxu0 0
        %521 = vmatprep.subr.bf16.mxu0 0
        %522 = vmatpush2.bf16.msra.mxu0 0
        %523 = vmatprep.mubr.bf16.mxu0 0
        %524 = vmatmul.mubr.bf16.gmra.mxu0 %v446
        %v525 = vpop.f32.mrf.mxu0
        %v526 = vadd.f32 0.0, %v525
        %v527 = vpop.f32.mrf.mxu0
        %v528 = vpop.f32.mrf.mxu0
        %v529 = vadd.f32 0.0, %v528
        %v530 = vpop.f32.mrf.mxu0
        %531 = vdwg.mxu0
        %532 = vst.msk [vmem:[#allocation2 + $0x10] sm:$0xff] %vm444, %v526
        %533 = vst.msk [vmem:[#allocation2 + $0x18] sm:$0xff] %vm444, %v529
        %534 = vmatprep.subr.bf16.mxu0 0
        %535 = vmatpush1.bf16.msra.mxu0 0
        %536 = vmatprep.subr.bf16.mxu0 0
        %537 = vmatpush1.bf16.msra.mxu0 0
        %538 = vmatprep.subr.bf16.mxu0 0
        %539 = vmatpush1.bf16.msra.mxu0 0
        %540 = vmatprep.subr.bf16.mxu0 0
        %541 = vmatpush1.bf16.msra.mxu0 0
        %542 = vmatprep.subr.bf16.mxu0 0
        %543 = vmatpush1.bf16.msra.mxu0 0
        %544 = vmatprep.subr.bf16.mxu0 0
        %545 = vmatpush1.bf16.msra.mxu0 0
        %546 = vmatprep.subr.bf16.mxu0 0
        %547 = vmatpush1.bf16.msra.mxu0 0
        %548 = vmatprep.subr.bf16.mxu0 0
        %549 = vmatpush1.bf16.msra.mxu0 %v436
        %550 = vmatprep.subr.bf16.mxu0 0
        %551 = vmatpush2.bf16.msra.mxu0 0
        %552 = vmatprep.subr.bf16.mxu0 0
        %553 = vmatpush2.bf16.msra.mxu0 0
        %554 = vmatprep.subr.bf16.mxu0 0
        %555 = vmatpush2.bf16.msra.mxu0 0
        %556 = vmatprep.subr.bf16.mxu0 0
        %557 = vmatpush2.bf16.msra.mxu0 0
        %558 = vmatprep.subr.bf16.mxu0 0
        %559 = vmatpush2.bf16.msra.mxu0 0
        %560 = vmatprep.subr.bf16.mxu0 0
        %561 = vmatpush2.bf16.msra.mxu0 0
        %562 = vmatprep.subr.bf16.mxu0 0
        %563 = vmatpush2.bf16.msra.mxu0 0
        %564 = vmatprep.subr.bf16.mxu0 0
        %565 = vmatpush2.bf16.msra.mxu0 0
        %566 = vmatprep.mubr.bf16.mxu0 0
        %567 = vmatmul.mubr.bf16.gmra.mxu0 %v446
        %v568 = vpop.f32.mrf.mxu0
        %v569 = vadd.f32 0.0, %v568
        %v570 = vpop.f32.mrf.mxu0
        %v571 = vpop.f32.mrf.mxu0
        %v572 = vadd.f32 0.0, %v571
        %v573 = vpop.f32.mrf.mxu0
        %574 = vdwg.mxu0
        %575 = vst.msk [vmem:[#allocation2 + $0x20] sm:$0xff] %vm444, %v569
        %576 = vst.msk [vmem:[#allocation2 + $0x28] sm:$0xff] %vm444, %v572
        %v577 = vld [vmem:[#allocation2] sm:$0xff]
        %v578 = vld [vmem:[#allocation2 + $0x8] sm:$0xff]
        %v579 = vld [vmem:[#allocation2 + $0x10] sm:$0xff]
        %v580 = vld [vmem:[#allocation2 + $0x18] sm:$0xff]
        %v581 = vld [vmem:[#allocation2 + $0x20] sm:$0xff]
        %v582 = vld [vmem:[#allocation2 + $0x28] sm:$0xff]
        %v583 = vpack.c.bf16 %v578, %v577
        %v584 = vpack.c.bf16 %v580, %v579
        %v585 = vpack.c.bf16 %v582, %v581
        %v586 = vld [vmem:[%s7] sm:$0xf]
        %v587 = vld [vmem:[%s7 + $0x4] sm:$0xf]
        %v590 = vunpack.c.l.b16 %v586
        %v591 = vunpack.c.l.b16 %v587
        %v592 = vpack.c.b16 %v591, %v590
        %v595 = vsel %vm444, %v583, 0
        %v598 = vsel %vm444, %v584, 0
        %v601 = vsel %vm444, %v585, 0
        %603 = vmatprep.subr.bf16.mxu0 0
        %604 = vmatpush1.bf16.msra.mxu0 0
        %605 = vmatprep.subr.bf16.mxu0 0
        %606 = vmatpush1.bf16.msra.mxu0 0
        %607 = vmatprep.subr.bf16.mxu0 0
        %608 = vmatpush1.bf16.msra.mxu0 0
        %609 = vmatprep.subr.bf16.mxu0 0
        %610 = vmatpush1.bf16.msra.mxu0 0
        %611 = vmatprep.subr.bf16.mxu0 0
        %612 = vmatpush1.bf16.msra.mxu0 0
        %613 = vmatprep.subr.bf16.mxu0 0
        %614 = vmatpush1.bf16.msra.mxu0 0
        %615 = vmatprep.subr.bf16.mxu0 0
        %616 = vmatpush1.bf16.msra.mxu0 0
        %617 = vmatprep.subr.bf16.mxu0 0
        %618 = vmatpush1.bf16.msra.mxu0 %v592
        %619 = vmatprep.subr.bf16.mxu0 0
        %620 = vmatpush2.bf16.msra.mxu0 0
        %621 = vmatprep.subr.bf16.mxu0 0
        %622 = vmatpush2.bf16.msra.mxu0 0
        %623 = vmatprep.subr.bf16.mxu0 0
        %624 = vmatpush2.bf16.msra.mxu0 0
        %625 = vmatprep.subr.bf16.mxu0 0
        %626 = vmatpush2.bf16.msra.mxu0 0
        %627 = vmatprep.subr.bf16.mxu0 0
        %628 = vmatpush2.bf16.msra.mxu0 0
        %629 = vmatprep.subr.bf16.mxu0 0
        %630 = vmatpush2.bf16.msra.mxu0 0
        %631 = vmatprep.subr.bf16.mxu0 0
        %632 = vmatpush2.bf16.msra.mxu0 0
        %633 = vmatprep.subr.bf16.mxu0 0
        %634 = vmatpush2.bf16.msra.mxu0 0
        %635 = vmatprep.mubr.bf16.mxu0 0
        %636 = vmatmul.mubr.bf16.gmra.mxu0 %v595
        %v637 = vpop.f32.mrf.mxu0
        %v638 = vadd.f32 0.0, %v637
        %v639 = vpop.f32.mrf.mxu0
        %v640 = vpop.f32.mrf.mxu0
        %v641 = vadd.f32 0.0, %v640
        %v642 = vpop.f32.mrf.mxu0
        %643 = vmatprep.mubr.bf16.mxu0 0
        %644 = vmatmul.mubr.bf16.gmra.mxu0 %v598
        %v645 = vpop.f32.mrf.mxu0
        %v646 = vadd.f32 0.0, %v645
        %v647 = vpop.f32.mrf.mxu0
        %v648 = vpop.f32.mrf.mxu0
        %v649 = vadd.f32 0.0, %v648
        %v650 = vpop.f32.mrf.mxu0
        %651 = vmatprep.mubr.bf16.mxu0 0
        %652 = vmatmul.mubr.bf16.gmra.mxu0 %v601
        %v653 = vpop.f32.mrf.mxu0
        %v654 = vadd.f32 0.0, %v653
        %v655 = vpop.f32.mrf.mxu0
        %v656 = vpop.f32.mrf.mxu0
        %v657 = vadd.f32 0.0, %v656
        %v658 = vpop.f32.mrf.mxu0
        %659 = vdwg.mxu0
        %660 = vst.msk [vmem:[#allocation2] sm:$0xff] %vm444, %v638
        %661 = vst.msk [vmem:[#allocation2 + $0x8] sm:$0xff] %vm444, %v641
        %662 = vst.msk [vmem:[#allocation2 + $0x10] sm:$0xff] %vm444, %v646
        %663 = vst.msk [vmem:[#allocation2 + $0x18] sm:$0xff] %vm444, %v649
        %664 = vst.msk [vmem:[#allocation2 + $0x20] sm:$0xff] %vm444, %v654
        %665 = vst.msk [vmem:[#allocation2 + $0x28] sm:$0xff] %vm444, %v657
      $region52: #{tpu_custom_call.1} parent=31 // pred_fallthru
        _
      %v666 = vld [vmem:[#allocation2] sm:$0xff]
      %v667 = vld [vmem:[#allocation2 + $0x8] sm:$0xff]
      %v668 = vld [vmem:[#allocation2 + $0x10] sm:$0xff]
      %v669 = vld [vmem:[#allocation2 + $0x18] sm:$0xff]
      %v670 = vld [vmem:[#allocation2 + $0x20] sm:$0xff]
      %v671 = vld [vmem:[#allocation2 + $0x28] sm:$0xff]
      %v672 = vstv %s212
      %v673 = vmul.f32 %v666, %v672
      %v674 = vmul.f32 %v667, %v672
      %v675 = vmul.f32 %v668, %v672
      %v676 = vmul.f32 %v669, %v672
      %v677 = vmul.f32 %v670, %v672
      %v678 = vmul.f32 %v671, %v672
      %v679 = vmax.f32 %v673, 0.0
      %v680 = vmax.f32 %v674, 0.0
      %v681 = vmax.f32 %v675, 0.0
      %v682 = vmax.f32 %v676, 0.0
      %v683 = vmax.f32 %v677, 0.0
      %v684 = vmax.f32 %v678, 0.0
      %v685 = vmin.f32 %v679, 1.0
      %v686 = vmin.f32 %v680, 1.0
      %v687 = vmin.f32 %v681, 1.0
      %v688 = vmin.f32 %v682, 1.0
      %v689 = vmin.f32 %v683, 1.0
      %v690 = vmin.f32 %v684, 1.0
      %vm691 = vcmask 130048
      %692 = vst.msk [vmem:[#allocation2] sm:$0xff] %vm691, %v685
      %693 = vst.msk [vmem:[#allocation2 + $0x8] sm:$0xff] %vm691, %v686
      %694 = vst.msk [vmem:[#allocation2 + $0x10] sm:$0xff] %vm691, %v687
      %695 = vst.msk [vmem:[#allocation2 + $0x18] sm:$0xff] %vm691, %v688
      %696 = vst.msk [vmem:[#allocation2 + $0x20] sm:$0xff] %vm691, %v689
      %697 = vst.msk [vmem:[#allocation2 + $0x28] sm:$0xff] %vm691, %v690
      %v698 = vld [vmem:[#allocation2] sm:$0xff]
      %v699 = vld [vmem:[#allocation2 + $0x8] sm:$0xff]
      %v700 = vmul.f32 %v698, 0.299
      %v701 = vmul.f32 %v699, 0.299
      %v702 = vld [vmem:[#allocation2 + $0x10] sm:$0xff]
      %v703 = vld [vmem:[#allocation2 + $0x18] sm:$0xff]
      %v704 = vmul.f32 %v702, 0.587
      %v705 = vmul.f32 %v703, 0.587
      %v706 = vadd.f32 %v700, %v704
      %v707 = vadd.f32 %v701, %v705
      %v708 = vld [vmem:[#allocation2 + $0x20] sm:$0xff]
      %v709 = vld [vmem:[#allocation2 + $0x28] sm:$0xff]
      %v710 = vmul.f32 %v708, 0.114
      %v711 = vmul.f32 %v709, 0.114
      %v712 = vadd.f32 %v706, %v710
      %v713 = vadd.f32 %v707, %v711
      %v714 = vsel %vm691, %v712, 0.0
      %v715 = vsel %vm691, %v713, 0.0
      %v716 = vadd.f32 %v714, %v715
      %717 = vadd.xlane.f32.xlu0 %v716
      %v718 = vpop.xlane.xlu0 %717
      %v719 = vrot.slane %v718, 4
      %v720 = vadd.f32 %v718, %v719
      %v721 = vrot.slane %v720, 2
      %v722 = vadd.f32 %v720, %v721
      %v723 = vrot.slane %v722, 1
      %v724 = vadd.f32 %v722, %v723
      %s725 = vtos %v724
      %v726 = vrcp.pop 256.0
      %s727 = vtos %v726
      %s728 = smul.f32 %s725, %s727
      %v729 = vstv %s213
      %v730 = vmul.f32 %v729, %v698
      %v731 = vmul.f32 %v729, %v699
      %v732 = vmul.f32 %v729, %v702
      %v733 = vmul.f32 %v729, %v703
      %v734 = vmul.f32 %v729, %v708
      %v735 = vmul.f32 %v729, %v709
      %s736 = ssub.f32 1.0, %s213
      %s737 = smul.f32 %s736, %s728
      %v738 = vstv %s737
      %v739 = vadd.f32 %v730, %v738
      %v740 = vadd.f32 %v731, %v738
      %v741 = vadd.f32 %v732, %v738
      %v742 = vadd.f32 %v733, %v738
      %v743 = vadd.f32 %v734, %v738
      %v744 = vadd.f32 %v735, %v738
      %v745 = vmax.f32 %v739, 0.0
      %v746 = vmax.f32 %v740, 0.0
      %v747 = vmax.f32 %v741, 0.0
      %v748 = vmax.f32 %v742, 0.0
      %v749 = vmax.f32 %v743, 0.0
      %v750 = vmax.f32 %v744, 0.0
      %v751 = vmin.f32 %v745, 1.0
      %v752 = vmin.f32 %v746, 1.0
      %v753 = vmin.f32 %v747, 1.0
      %v754 = vmin.f32 %v748, 1.0
      %v755 = vmin.f32 %v749, 1.0
      %v756 = vmin.f32 %v750, 1.0
      %v757 = vmul.f32 %v751, 0.299
      %v758 = vmul.f32 %v752, 0.299
      %v759 = vmul.f32 %v753, 0.587
      %v760 = vmul.f32 %v754, 0.587
      %v761 = vadd.f32 %v757, %v759
      %v762 = vadd.f32 %v758, %v760
      %v763 = vmul.f32 %v755, 0.114
      %v764 = vmul.f32 %v756, 0.114
      %v765 = vadd.f32 %v761, %v763
      %v766 = vadd.f32 %v762, %v764
      %v767 = vstv %s214
      %v768 = vmul.f32 %v767, %v751
      %v769 = vmul.f32 %v767, %v752
      %v770 = vmul.f32 %v767, %v753
      %v771 = vmul.f32 %v767, %v754
      %v772 = vmul.f32 %v767, %v755
      %v773 = vmul.f32 %v767, %v756
      %s774 = ssub.f32 1.0, %s214
      %v775 = vstv %s774
      %v776 = vmul.f32 %v775, %v765
      %v777 = vmul.f32 %v775, %v766
      %v778 = vadd.f32 %v768, %v776
      %v779 = vadd.f32 %v769, %v777
      %v780 = vadd.f32 %v770, %v776
      %v781 = vadd.f32 %v771, %v777
      %v782 = vadd.f32 %v772, %v776
      %v783 = vadd.f32 %v773, %v777
      %v784 = vmax.f32 %v778, 0.0
      %v785 = vmax.f32 %v779, 0.0
      %v786 = vmax.f32 %v780, 0.0
      %v787 = vmax.f32 %v781, 0.0
      %v788 = vmax.f32 %v782, 0.0
      %v789 = vmax.f32 %v783, 0.0
      %v790 = vmin.f32 %v784, 1.0
      %v791 = vmin.f32 %v785, 1.0
      %v792 = vmin.f32 %v786, 1.0
      %v793 = vmin.f32 %v787, 1.0
      %v794 = vmin.f32 %v788, 1.0
      %v795 = vmin.f32 %v789, 1.0
      %797 = vset.pattern.permute.xlu0 0
      %798 = vperm.xlu0 %797, 0.485
      %v799 = vpop.permute.xlu0 %798
      %802 = vset.pattern.permute.xlu0 0
      %803 = vperm.xlu0 %802, 0.456
      %v804 = vpop.permute.xlu0 %803
      %807 = vset.pattern.permute.xlu0 0
      %808 = vperm.xlu0 %807, 0.406
      %v809 = vpop.permute.xlu0 %808
      %v811 = vsub.f32 %v790, %v799
      %v812 = vsub.f32 %v791, %v799
      %v813 = vsub.f32 %v792, %v804
      %v814 = vsub.f32 %v793, %v804
      %v815 = vsub.f32 %v794, %v809
      %v816 = vsub.f32 %v795, %v809
      %818 = vset.pattern.permute.xlu0 0
      %819 = vperm.xlu0 %818, 4.366812
      %v820 = vpop.permute.xlu0 %819
      %823 = vset.pattern.permute.xlu0 0
      %824 = vperm.xlu0 %823, 4.464286
      %v825 = vpop.permute.xlu0 %824
      %828 = vset.pattern.permute.xlu0 0
      %829 = vperm.xlu0 %828, 4.4444447
      %v830 = vpop.permute.xlu0 %829
      %v832 = vmul.f32 %v811, %v820
      %v833 = vmul.f32 %v812, %v820
      %v834 = vmul.f32 %v813, %v825
      %v835 = vmul.f32 %v814, %v825
      %v836 = vmul.f32 %v815, %v830
      %v837 = vmul.f32 %v816, %v830
      %838 = vst.msk [vmem:[%s197] sm:$0xff] %vm691, %v832
      %839 = vst.msk [vmem:[%s197 + $0x8] sm:$0xff] %vm691, %v833
      %840 = vst.msk [vmem:[%s197 + $0x10] sm:$0xff] %vm691, %v834
      %841 = vst.msk [vmem:[%s197 + $0x18] sm:$0xff] %vm691, %v835
      %842 = vst.msk [vmem:[%s197 + $0x20] sm:$0xff] %vm691, %v836
      %843 = vst.msk [vmem:[%s197 + $0x28] sm:$0xff] %vm691, %v837
      %p844 = scmp.lt.s32.totalorder %s41, 1
      %s845 = scalar_select %p844, %s41, 1
      %s846 = smul.addr %s845, 6
      %s847 = smul.addr %s846, 8
      %s848 = scalar_lea.vmem %s8, %s847
      // Predicated region
      $region53: #{tpu_custom_call.1} parent=31 // pred_check
        %p849 = pneg %p127
      $region54: #{tpu_custom_call.1} parent=31 // pred_check_branch
        %851 = sbr.rel (%p849) target = $region56
      $region55: #{tpu_custom_call.1} parent=31 // pred_region
        _
      $region56: #{tpu_custom_call.1} parent=31 // pred_fallthru
        _
    $region32: #{tpu_custom_call.1} parent=5 // pred_fallthru
      _
    %p852 = scmp.le.s32.totalorder 2, %s36
    // Predicated region
    $region57: #{tpu_custom_call.1} parent=5 // pred_check
      %p853 = pneg %p852
    $region58: #{tpu_custom_call.1} parent=5 // pred_check_branch
      %855 = sbr.rel (%p853) target = $region60
    $region59: #{tpu_custom_call.1} parent=5 // pred_region
      %s856 = ssub.s32 %s36, 2
      // Predicated region
      $region61: #{tpu_custom_call.1} parent=59 // pred_check
        %p857 = pneg %p133
      $region62: #{tpu_custom_call.1} parent=59 // pred_check_branch
        %859 = sbr.rel (%p857) target = $region64
      $region63: #{tpu_custom_call.1} parent=59 // pred_region
        %p860 = scmp.lt.s32.totalorder %s42, 1
        %s861 = scalar_select %p860, %s42, 1
        %s862 = smul.addr %s861, 6
        %s863 = smul.addr %s862, 8
        %s864 = scalar_lea.vmem %s8, %s863
      $region64: #{tpu_custom_call.1} parent=59 // pred_fallthru
        _
    $region60: #{tpu_custom_call.1} parent=5 // pred_fallthru
      _
  $region6: #{tpu_custom_call.1} parent=0 // loop_footer
    %s40 = sadd.s32 1, %s36
  $region7: #{tpu_custom_call.1} parent=0 // loop_footer_branch
    %35 = sbr.rel target = $region3
  $region8: #{tpu_custom_call.1} parent=0 // loop_exit
    _

</llo_original>
